<compile_context>
chip_gen: v7x
topology: tpu7x:2x2x1
jax: 0.10.0
libtpu: 0.0.40
codegen_flags: <defaults>
</compile_context>

<pallas_src>
import jax
import jax.numpy as jnp
from jax import lax
from jax.experimental import pallas as pl
from jax.experimental.pallas import tpu as pltpu


def _round_up(v: int, m: int) -> int:
    return (v + m - 1) // m * m


def _vmem_capacity_bytes() -> int:
    """Physical VMEM per TensorCore; conservative fallback if query fails."""
    try:
        info = pltpu.get_tpu_info()
        cap = getattr(info, "vmem_capacity_bytes", None)
        if cap:
            return int(cap)
    except Exception:
        pass
    return 64 << 20  # v7x per-TC size: safe lower bound for v5e/v6e too


def _vmem_estimate(tm: int, th: int, Cp: int,
                   in_bytes: int, out_bytes: int, w_bytes: int) -> int:
    """Rough per-step VMEM usage INCLUDING Pallas's default double-buffering."""
    act = 2 * 2 * tm * Cp * in_bytes        # x & y token tiles, 2 buffers each
    out = 2 * 2 * tm * Cp * out_bytes       # ox & oy tiles, 2 buffers each
    wts = 2 * 2 * Cp * th * w_bytes         # w1 & w2 chunks, 2 buffers each
    bias = 2 * 8 * th * 4 + 2 * 8 * Cp * 4  # biases (sublane-padded)
    acc = 2 * tm * Cp * 4                   # f32 accumulators (scratch)
    inter = 2 * tm * th * (4 + w_bytes)     # per-stream f32 h + cast copy
    return act + out + wts + bias + acc + inter


def _choose_tiles(M: int, Cp: int, Hp: int,
                  in_bytes: int, out_bytes: int, w_bytes: int,
                  budget: int) -> tuple[int, int]:
    """Pick (tm, th): 128-aligned, biggest that fits the VMEM budget."""
    if M >= 128:
        m_cap = _round_up(M, 128)
    else:
        m_cap = _round_up(max(M, 1), 8)
    # Larger token tiles when C is small (tiles are cheap, amortize grid-step
    # overhead); 128-multiples otherwise for clean MXU cadence.
    base_tm = [2048, 1024, 512, 256, 128] if Cp <= 256 else [1024, 512, 256, 128]
    tm_opts = []
    for t in base_tm:
        t = min(t, m_cap)
        if t not in tm_opts:
            tm_opts.append(t)
    th_opts = []
    for t in [1024, 512, 256, 128]:
        t = min(t, Hp)
        if t not in th_opts:
            th_opts.append(t)

    th_pref = min(Hp, 256)  # prefer not to shrink the H chunk below 256
    for min_th in (th_pref, 128):
        for tm in tm_opts:
            for th in th_opts:
                if th < min_th:
                    continue
                if _vmem_estimate(tm, th, Cp, in_bytes, out_bytes, w_bytes) <= budget:
                    return tm, th
    return tm_opts[-1], th_opts[-1]


def mlp_block1_kernel(x_ref, y_ref, w1_ref, b1_ref, w2_ref, b2_ref,
                      ox_ref, oy_ref, accx_ref, accy_ref):
    """One (tm, Cp) token tile of BOTH streams through one H-chunk.

    x_ref/y_ref:   (tm, Cp)   token tiles (f32 or bf16)
    w1_ref:        (Cp, th)   effective lin1 weight chunk (pre-transposed)
    b1_ref:        (1,  th)   f32 bias chunk
    w2_ref:        (th, Cp)   effective lin2 weight chunk (pre-transposed)
    b2_ref:        (1,  Cp)   f32
    ox_ref/oy_ref: (tm, Cp)   outputs (written on the last H-chunk)
    accx/accy:     (tm, Cp)   f32 accumulator scratch
    """
    k = pl.program_id(1)

    @pl.when(k == 0)
    def _init():
        accx_ref[...] = jnp.zeros_like(accx_ref)
        accy_ref[...] = jnp.zeros_like(accy_ref)

    w1 = w1_ref[...]
    w2 = w2_ref[...]
    b1 = b1_ref[...]
    cdt = w1_ref.dtype  # MXU input dtype (bf16 default)

    def _stream(tokens, acc_ref):
        # lin1 chunk on the MXU (f32 accumulate), bias add in f32
        h = jnp.dot(tokens.astype(cdt), w1,
                    preferred_element_type=jnp.float32) + b1
        # tanh-approx GELU in f32: exp/tanh run on the EUP (separate VLIW slot)
        h = jax.nn.gelu(h, approximate=True)
        # lin2 chunk on the MXU, accumulate over H-chunks
        acc_ref[...] += jnp.dot(h.astype(cdt), w2,
                                preferred_element_type=jnp.float32)

    # Both streams reuse the same resident weight chunk (shared LoRA Linear).
    _stream(x_ref[...], accx_ref)
    _stream(y_ref[...], accy_ref)

    @pl.when(k == pl.num_programs(1) - 1)
    def _finalize():
        b2 = b2_ref[...]
        ox_ref[...] = (accx_ref[...] + b2).astype(ox_ref.dtype)
        oy_ref[...] = (accy_ref[...] + b2).astype(oy_ref.dtype)


def mlp_block1(x, y, w1, b1, w2, b2, lora_b1, lora_a1, lora_b2, lora_a2,
               *, weight_dtype=jnp.bfloat16, out_dtype=None):
    """Forward of MLPBlock1: returns (out_x, out_y).

    PyTorch parameter layouts:
      w1: (H, C), b1: (H,), lora_b1: (H, r), lora_a1: (r, C)
      w2: (C, H), b2: (C,), lora_b2: (C, r), lora_a2: (r, H)
    """
    assert x.shape == y.shape
    B, N, C = x.shape
    H = w1.shape[0]
    M = B * N
    out_dtype = x.dtype if out_dtype is None else out_dtype

    # TODO(synk): lora_Linear is not defined in the source file; it is modeled
    # here as base Linear + (B @ A) low-rank delta with unit scaling, applied
    # with shared weights to both streams (fold happens in f32). If the delta
    # is much smaller than |W|, pass weight_dtype=jnp.float32 so the bf16 cast
    # does not swallow it.
    w1_eff = w1.astype(jnp.float32) + lora_b1.astype(jnp.float32) @ lora_a1.astype(jnp.float32)
    w2_eff = w2.astype(jnp.float32) + lora_b2.astype(jnp.float32) @ lora_a2.astype(jnp.float32)

    # ---- padded, lane-dense shapes -----------------------------------------
    Cp = _round_up(C, 128)
    Hp = _round_up(H, 128)
    w_bytes = jnp.dtype(weight_dtype).itemsize
    compute_dtype = jnp.bfloat16 if jnp.dtype(weight_dtype) == jnp.dtype(jnp.bfloat16) \
        else jnp.float32
    out_bytes = jnp.dtype(out_dtype).itemsize
    # if C needs padding, the (unavoidable) pad copy is written in the compute
    # dtype (bf16) -> halves the kernel's input DMA bytes; otherwise no copy.
    in_bytes = jnp.dtype(x.dtype).itemsize if C == Cp \
        else jnp.dtype(compute_dtype).itemsize

    # ---- generation-aware VMEM budget and tile choice ----------------------
    capacity = _vmem_capacity_bytes()
    budget = max(capacity - (8 << 20), 16 << 20)        # headroom for compiler
    tm, th = _choose_tiles(M, Cp, Hp, in_bytes, out_bytes, w_bytes, budget)
    grid_m = pl.cdiv(M, tm)
    grid_h = Hp // th
    Mp = grid_m * tm

    est = _vmem_estimate(tm, th, Cp, in_bytes, out_bytes, w_bytes)
    vmem_limit = int(max(min(budget, int(est * 1.25) + (2 << 20)), 16 << 20))

    # ---- host-side prep (one pass, skipped if already aligned) -------------
    def _prep(t):
        t2 = t.reshape(M, C)
        if M == Mp and C == Cp:
            return t2                              # no extra HBM pass
        dt = compute_dtype if C != Cp else t2.dtype
        return jnp.zeros((Mp, Cp), dt).at[:M, :C].set(t2.astype(dt))

    x2 = _prep(x)
    y2 = _prep(y)
    w1t = jnp.zeros((Cp, Hp), weight_dtype).at[:C, :H].set(
        w1_eff.T.astype(weight_dtype))
    w2t = jnp.zeros((Hp, Cp), weight_dtype).at[:H, :C].set(
        w2_eff.T.astype(weight_dtype))
    b1r = jnp.zeros((1, Hp), jnp.float32).at[:, :H].set(b1.astype(jnp.float32))
    b2r = jnp.zeros((1, Cp), jnp.float32).at[:, :C].set(b2.astype(jnp.float32))

    ox, oy = pl.pallas_call(
        mlp_block1_kernel,
        out_shape=(jax.ShapeDtypeStruct((Mp, Cp), out_dtype),
                   jax.ShapeDtypeStruct((Mp, Cp), out_dtype)),
        grid=(grid_m, grid_h),
        in_specs=[
            pl.BlockSpec((tm, Cp), lambda i, k: (i, 0)),   # x tile (const in k)
            pl.BlockSpec((tm, Cp), lambda i, k: (i, 0)),   # y tile (const in k)
            pl.BlockSpec((Cp, th), lambda i, k: (0, k)),   # w1 chunk (streamed)
            pl.BlockSpec((1, th),  lambda i, k: (0, k)),   # b1 chunk
            pl.BlockSpec((th, Cp), lambda i, k: (k, 0)),   # w2 chunk (streamed)
            pl.BlockSpec((1, Cp),  lambda i, k: (0, 0)),   # b2
        ],
        out_specs=(
            pl.BlockSpec((tm, Cp), lambda i, k: (i, 0)),
            pl.BlockSpec((tm, Cp), lambda i, k: (i, 0)),
        ),
        scratch_shapes=[pltpu.VMEM((tm, Cp), jnp.float32),
                        pltpu.VMEM((tm, Cp), jnp.float32)],
        compiler_params=pltpu.CompilerParams(
            # M tiles independent -> v7x's two TensorCores split them;
            # H-chunk axis is a reduction over the resident accumulator.
            dimension_semantics=("parallel", "arbitrary"),
            vmem_limit_bytes=vmem_limit,
        ),
    )(x2, y2, w1t, b1r, w2t, b2r)

    out_x = ox[:M, :C].reshape(B, N, C)
    out_y = oy[:M, :C].reshape(B, N, C)
    return out_x, out_y


if __name__ == "__main__":
    B, N = 2, 8
    embedding_dim, mlp_dim, lora_rank = 32, 64, 4

    key = jax.random.PRNGKey(0)
    (kx, ky, kw1, kb1, kw2, kb2,
     ka1, kbb1, ka2, kbb2) = jax.random.split(key, 10)

    x = jax.random.normal(kx, (B, N, embedding_dim), dtype=jnp.float32)
    y = jax.random.normal(ky, (B, N, embedding_dim), dtype=jnp.float32)

    # PyTorch nn.Linear / LoRA parameter shapes, deterministic synthetic values
    w1 = jax.random.normal(kw1, (mlp_dim, embedding_dim), jnp.float32) * 0.02
    b1 = jax.random.normal(kb1, (mlp_dim,), jnp.float32) * 0.02
    w2 = jax.random.normal(kw2, (embedding_dim, mlp_dim), jnp.float32) * 0.02
    b2 = jax.random.normal(kb2, (embedding_dim,), jnp.float32) * 0.02
    lora_a1 = jax.random.normal(ka1, (lora_rank, embedding_dim), jnp.float32) * 0.02
    lora_b1 = jax.random.normal(kbb1, (mlp_dim, lora_rank), jnp.float32) * 0.02
    lora_a2 = jax.random.normal(ka2, (lora_rank, mlp_dim), jnp.float32) * 0.02
    lora_b2 = jax.random.normal(kbb2, (embedding_dim, lora_rank), jnp.float32) * 0.02

    out_x, out_y = mlp_block1(x, y, w1, b1, w2, b2,
                              lora_b1, lora_a1, lora_b2, lora_a2)
    jax.block_until_ready((out_x, out_y))

    # pure-JAX f32 reference (exact erf GELU, matching torch.nn.GELU default;
    # the kernel uses the tanh approximation -> ~1e-3 diff, inside tolerance)
    w1_eff = w1 + lora_b1 @ lora_a1
    w2_eff = w2 + lora_b2 @ lora_a2

    def ref_fwd(t):
        h = t @ w1_eff.T + b1
        h = 0.5 * h * (1.0 + lax.erf(h / jnp.sqrt(2.0)))
        return h @ w2_eff.T + b2

    ref_x, ref_y = ref_fwd(x), ref_fwd(y)
    assert out_x.shape == (B, N, embedding_dim)
    assert out_y.shape == (B, N, embedding_dim)
    # bf16 matmuls (f32 accumulation) + tanh-GELU vs. f32/erf reference
    assert jnp.allclose(out_x, ref_x, atol=2e-2, rtol=2e-2), \
        float(jnp.max(jnp.abs(out_x - ref_x)))
    assert jnp.allclose(out_y, ref_y, atol=2e-2, rtol=2e-2), \
        float(jnp.max(jnp.abs(out_y - ref_y)))

    print("KERNEL_OK")
</pallas_src>

<mosaic_0001>
module attributes {stable_mosaic.version = 11 : i64} {
  func.func @mlp_block1_kernel(%arg0: i32, %arg1: i32, %arg2: memref<16x128xbf16, #tpu.memory_space<vmem>>, %arg3: memref<16x128xbf16, #tpu.memory_space<vmem>>, %arg4: memref<128x128xbf16, #tpu.memory_space<vmem>>, %arg5: memref<1x128xf32, #tpu.memory_space<vmem>>, %arg6: memref<128x128xbf16, #tpu.memory_space<vmem>>, %arg7: memref<1x128xf32, #tpu.memory_space<vmem>>, %arg8: memref<16x128xf32, #tpu.memory_space<vmem>>, %arg9: memref<16x128xf32, #tpu.memory_space<vmem>>, %arg10: memref<16x128xf32, #tpu.memory_space<vmem>>, %arg11: memref<16x128xf32, #tpu.memory_space<vmem>>) attributes {dimension_semantics = [#tpu.dimension_semantics<parallel>, #tpu.dimension_semantics<arbitrary>], iteration_bounds = array<i64: 1, 1>, scalar_prefetch = 0 : i64, scratch_operands = 2 : i64, tpu.core_type = #tpu.core_type<tc>, window_params = [{transform_indices = @transform_0, window_bounds = array<i64: 16, 128>}, {transform_indices = @transform_1, window_bounds = array<i64: 16, 128>}, {transform_indices = @transform_2, window_bounds = array<i64: 128, 128>}, {transform_indices = @transform_3, window_bounds = array<i64: 1, 128>}, {transform_indices = @transform_4, window_bounds = array<i64: 128, 128>}, {pipeline_mode = #tpu.pipeline_mode<synchronous>, transform_indices = @transform_5, window_bounds = array<i64: 1, 128>}, {transform_indices = @transform_6, window_bounds = array<i64: 16, 128>}, {transform_indices = @transform_7, window_bounds = array<i64: 16, 128>}]} {
    %c0_i32 = arith.constant 0 : i32
    %0 = arith.cmpi eq, %arg1, %c0_i32 : i32
    %1 = arith.extui %0 : i1 to i32
    %c0_i32_0 = arith.constant 0 : i32
    %2 = arith.cmpi ne, %1, %c0_i32_0 : i32
    scf.if %2 {
      %cst_31 = arith.constant 0.000000e+00 : f32
      %53 = vector.broadcast %cst_31 : f32 to vector<16x128xf32>
      %c0_32 = arith.constant 0 : index
      %c0_33 = arith.constant 0 : index
      %54 = vector.load %arg10[%c0_32, %c0_33] : memref<16x128xf32, #tpu.memory_space<vmem>>, vector<16x128xf32>
      tpu.vector_store %arg10[%c0_32, %c0_33], %53 {strides = array<i32>} : memref<16x128xf32, #tpu.memory_space<vmem>>, vector<16x128xf32>,
      %cst_34 = arith.constant 0.000000e+00 : f32
      %55 = vector.broadcast %cst_34 : f32 to vector<16x128xf32>
      %c0_35 = arith.constant 0 : index
      %c0_36 = arith.constant 0 : index
      %56 = vector.load %arg11[%c0_35, %c0_36] : memref<16x128xf32, #tpu.memory_space<vmem>>, vector<16x128xf32>
      tpu.vector_store %arg11[%c0_35, %c0_36], %55 {strides = array<i32>} : memref<16x128xf32, #tpu.memory_space<vmem>>, vector<16x128xf32>,
    } else {
    }
    %c0 = arith.constant 0 : index
    %c0_1 = arith.constant 0 : index
    %3 = vector.load %arg4[%c0, %c0_1] : memref<128x128xbf16, #tpu.memory_space<vmem>>, vector<128x128xbf16>
    %c0_2 = arith.constant 0 : index
    %c0_3 = arith.constant 0 : index
    %4 = vector.load %arg6[%c0_2, %c0_3] : memref<128x128xbf16, #tpu.memory_space<vmem>>, vector<128x128xbf16>
    %c0_4 = arith.constant 0 : index
    %c0_5 = arith.constant 0 : index
    %5 = vector.load %arg5[%c0_4, %c0_5] : memref<1x128xf32, #tpu.memory_space<vmem>>, vector<1x128xf32>
    %c0_6 = arith.constant 0 : index
    %c0_7 = arith.constant 0 : index
    %6 = vector.load %arg2[%c0_6, %c0_7] : memref<16x128xbf16, #tpu.memory_space<vmem>>, vector<16x128xbf16>
    %cst = arith.constant dense<0.000000e+00> : vector<16x128xf32>
    %7 = tpu.matmul %6, %3, %cst {dimension_numbers = #tpu.dot_dimension_numbers<[1], [0], [0], [1], [0, 0, 1, 1], [], []>} : vector<16x128xbf16>, vector<128x128xbf16>, vector<16x128xf32> -> vector<16x128xf32>
    %8 = vector.broadcast %5 : vector<1x128xf32> to vector<16x128xf32>
    %9 = arith.addf %7, %8 : vector<16x128xf32>
    %10 = arith.mulf %9, %9 : vector<16x128xf32>
    %11 = arith.mulf %9, %10 : vector<16x128xf32>
    %cst_8 = arith.constant 4.471500e-02 : f32
    %12 = vector.broadcast %cst_8 : f32 to vector<16x128xf32>
    %13 = arith.mulf %12, %11 : vector<16x128xf32>
    %14 = arith.addf %9, %13 : vector<16x128xf32>
    %cst_9 = arith.constant 0.797884583 : f32
    %15 = vector.broadcast %cst_9 : f32 to vector<16x128xf32>
    %16 = arith.mulf %15, %14 : vector<16x128xf32>
    %17 = math.tanh %16 : vector<16x128xf32>
    %cst_10 = arith.constant 1.000000e+00 : f32
    %18 = vector.broadcast %cst_10 : f32 to vector<16x128xf32>
    %19 = arith.addf %18, %17 : vector<16x128xf32>
    %cst_11 = arith.constant 5.000000e-01 : f32
    %20 = vector.broadcast %cst_11 : f32 to vector<16x128xf32>
    %21 = arith.mulf %20, %19 : vector<16x128xf32>
    %22 = arith.mulf %9, %21 : vector<16x128xf32>
    %c0_12 = arith.constant 0 : index
    %c0_13 = arith.constant 0 : index
    %23 = vector.load %arg10[%c0_12, %c0_13] : memref<16x128xf32, #tpu.memory_space<vmem>>, vector<16x128xf32>
    %24 = arith.truncf %22 : vector<16x128xf32> to vector<16x128xbf16>
    %cst_14 = arith.constant dense<0.000000e+00> : vector<16x128xf32>
    %25 = tpu.matmul %24, %4, %cst_14 {dimension_numbers = #tpu.dot_dimension_numbers<[1], [0], [0], [1], [0, 0, 1, 1], [], []>} : vector<16x128xbf16>, vector<128x128xbf16>, vector<16x128xf32> -> vector<16x128xf32>
    %26 = arith.addf %23, %25 : vector<16x128xf32>
    %c0_15 = arith.constant 0 : index
    %c0_16 = arith.constant 0 : index
    %27 = vector.load %arg10[%c0_15, %c0_16] : memref<16x128xf32, #tpu.memory_space<vmem>>, vector<16x128xf32>
    tpu.vector_store %arg10[%c0_15, %c0_16], %26 {strides = array<i32>} : memref<16x128xf32, #tpu.memory_space<vmem>>, vector<16x128xf32>,
    %c0_17 = arith.constant 0 : index
    %c0_18 = arith.constant 0 : index
    %28 = vector.load %arg3[%c0_17, %c0_18] : memref<16x128xbf16, #tpu.memory_space<vmem>>, vector<16x128xbf16>
    %cst_19 = arith.constant dense<0.000000e+00> : vector<16x128xf32>
    %29 = tpu.matmul %28, %3, %cst_19 {dimension_numbers = #tpu.dot_dimension_numbers<[1], [0], [0], [1], [0, 0, 1, 1], [], []>} : vector<16x128xbf16>, vector<128x128xbf16>, vector<16x128xf32> -> vector<16x128xf32>
    %30 = vector.broadcast %5 : vector<1x128xf32> to vector<16x128xf32>
    %31 = arith.addf %29, %30 : vector<16x128xf32>
    %32 = arith.mulf %31, %31 : vector<16x128xf32>
    %33 = arith.mulf %31, %32 : vector<16x128xf32>
    %cst_20 = arith.constant 4.471500e-02 : f32
    %34 = vector.broadcast %cst_20 : f32 to vector<16x128xf32>
    %35 = arith.mulf %34, %33 : vector<16x128xf32>
    %36 = arith.addf %31, %35 : vector<16x128xf32>
    %cst_21 = arith.constant 0.797884583 : f32
    %37 = vector.broadcast %cst_21 : f32 to vector<16x128xf32>
    %38 = arith.mulf %37, %36 : vector<16x128xf32>
    %39 = math.tanh %38 : vector<16x128xf32>
    %cst_22 = arith.constant 1.000000e+00 : f32
    %40 = vector.broadcast %cst_22 : f32 to vector<16x128xf32>
    %41 = arith.addf %40, %39 : vector<16x128xf32>
    %cst_23 = arith.constant 5.000000e-01 : f32
    %42 = vector.broadcast %cst_23 : f32 to vector<16x128xf32>
    %43 = arith.mulf %42, %41 : vector<16x128xf32>
    %44 = arith.mulf %31, %43 : vector<16x128xf32>
    %c0_24 = arith.constant 0 : index
    %c0_25 = arith.constant 0 : index
    %45 = vector.load %arg11[%c0_24, %c0_25] : memref<16x128xf32, #tpu.memory_space<vmem>>, vector<16x128xf32>
    %46 = arith.truncf %44 : vector<16x128xf32> to vector<16x128xbf16>
    %cst_26 = arith.constant dense<0.000000e+00> : vector<16x128xf32>
    %47 = tpu.matmul %46, %4, %cst_26 {dimension_numbers = #tpu.dot_dimension_numbers<[1], [0], [0], [1], [0, 0, 1, 1], [], []>} : vector<16x128xbf16>, vector<128x128xbf16>, vector<16x128xf32> -> vector<16x128xf32>
    %48 = arith.addf %45, %47 : vector<16x128xf32>
    %c0_27 = arith.constant 0 : index
    %c0_28 = arith.constant 0 : index
    %49 = vector.load %arg11[%c0_27, %c0_28] : memref<16x128xf32, #tpu.memory_space<vmem>>, vector<16x128xf32>
    tpu.vector_store %arg11[%c0_27, %c0_28], %48 {strides = array<i32>} : memref<16x128xf32, #tpu.memory_space<vmem>>, vector<16x128xf32>,
    %c0_i32_29 = arith.constant 0 : i32
    %50 = arith.cmpi eq, %arg1, %c0_i32_29 : i32
    %51 = arith.extui %50 : i1 to i32
    %c0_i32_30 = arith.constant 0 : i32
    %52 = arith.cmpi ne, %51, %c0_i32_30 : i32
    scf.if %52 {
      %c0_31 = arith.constant 0 : index
      %c0_32 = arith.constant 0 : index
      %53 = vector.load %arg7[%c0_31, %c0_32] : memref<1x128xf32, #tpu.memory_space<vmem>>, vector<1x128xf32>
      %c0_33 = arith.constant 0 : index
      %c0_34 = arith.constant 0 : index
      %54 = vector.load %arg10[%c0_33, %c0_34] : memref<16x128xf32, #tpu.memory_space<vmem>>, vector<16x128xf32>
      %55 = vector.broadcast %53 : vector<1x128xf32> to vector<16x128xf32>
      %56 = arith.addf %54, %55 : vector<16x128xf32>
      %c0_35 = arith.constant 0 : index
      %c0_36 = arith.constant 0 : index
      %57 = vector.load %arg8[%c0_35, %c0_36] : memref<16x128xf32, #tpu.memory_space<vmem>>, vector<16x128xf32>
      tpu.vector_store %arg8[%c0_35, %c0_36], %56 {strides = array<i32>} : memref<16x128xf32, #tpu.memory_space<vmem>>, vector<16x128xf32>,
      %c0_37 = arith.constant 0 : index
      %c0_38 = arith.constant 0 : index
      %58 = vector.load %arg11[%c0_37, %c0_38] : memref<16x128xf32, #tpu.memory_space<vmem>>, vector<16x128xf32>
      %59 = vector.broadcast %53 : vector<1x128xf32> to vector<16x128xf32>
      %60 = arith.addf %58, %59 : vector<16x128xf32>
      %c0_39 = arith.constant 0 : index
      %c0_40 = arith.constant 0 : index
      %61 = vector.load %arg9[%c0_39, %c0_40] : memref<16x128xf32, #tpu.memory_space<vmem>>, vector<16x128xf32>
      tpu.vector_store %arg9[%c0_39, %c0_40], %60 {strides = array<i32>} : memref<16x128xf32, #tpu.memory_space<vmem>>, vector<16x128xf32>,
    } else {
    }
    return
  }
  func.func @transform_0(%arg0: i32, %arg1: i32) -> (i32, i32) {
    %c0_i32 = arith.constant 0 : i32
    %c0_i32_0 = arith.constant 0 : i32
    return %arg0, %c0_i32 : i32, i32
  }
  func.func @transform_1(%arg0: i32, %arg1: i32) -> (i32, i32) {
    %c0_i32 = arith.constant 0 : i32
    %c0_i32_0 = arith.constant 0 : i32
    return %arg0, %c0_i32 : i32, i32
  }
  func.func @transform_2(%arg0: i32, %arg1: i32) -> (i32, i32) {
    %c0_i32 = arith.constant 0 : i32
    %c0_i32_0 = arith.constant 0 : i32
    return %c0_i32, %arg1 : i32, i32
  }
  func.func @transform_3(%arg0: i32, %arg1: i32) -> (i32, i32) {
    %c0_i32 = arith.constant 0 : i32
    %c0_i32_0 = arith.constant 0 : i32
    return %c0_i32, %arg1 : i32, i32
  }
  func.func @transform_4(%arg0: i32, %arg1: i32) -> (i32, i32) {
    %c0_i32 = arith.constant 0 : i32
    %c0_i32_0 = arith.constant 0 : i32
    return %arg1, %c0_i32 : i32, i32
  }
  func.func @transform_5(%arg0: i32, %arg1: i32) -> (i32, i32) {
    %c0_i32 = arith.constant 0 : i32
    %c0_i32_0 = arith.constant 0 : i32
    %c0_i32_1 = arith.constant 0 : i32
    return %c0_i32, %c0_i32_0 : i32, i32
  }
  func.func @transform_6(%arg0: i32, %arg1: i32) -> (i32, i32) {
    %c0_i32 = arith.constant 0 : i32
    %c0_i32_0 = arith.constant 0 : i32
    return %arg0, %c0_i32 : i32, i32
  }
  func.func @transform_7(%arg0: i32, %arg1: i32) -> (i32, i32) {
    %c0_i32 = arith.constant 0 : i32
    %c0_i32_0 = arith.constant 0 : i32
    return %arg0, %c0_i32 : i32, i32
  }
}

</mosaic_0001>

<llo_original>
// kernel: tpu_custom_call.1
$region0: #{tpu_custom_call.1}
  #allocation0 [shape = 'u32[]', space=smem, size = 0x4, offset = 0x4, fixed_abs, tag = 'smem constant byte address 0x4 - core index']
  #allocation1 [shape = 'u32[144,128]{1,0:T(1,128)}', space=vmem, size = 0x12000, scoped, tag = 'internal scratch']
  #allocation2 [shape = 'f32[16,128]{1,0:T(8,128)}', space=vmem, size = 0x2000, scoped, tag = 'scratch operand']
  #allocation3 [shape = 'f32[16,128]{1,0:T(8,128)}', space=vmem, size = 0x2000, scoped, tag = 'scratch operand']
  %s0 = inlined_call_operand.hbm [shape: bf16[16,128], index: 0, kind: input, shape index: {}]
  %s1 = inlined_call_operand.hbm [shape: bf16[16,128], index: 1, kind: input, shape index: {}]
  %s2 = inlined_call_operand.hbm [shape: bf16[128,128], index: 2, kind: input, shape index: {}]
  %s3 = inlined_call_operand.vmem [shape: f32[1,128], index: 3, kind: input, shape index: {}]
  %s4 = inlined_call_operand.hbm [shape: bf16[128,128], index: 4, kind: input, shape index: {}]
  %s5 = inlined_call_operand.vmem [shape: f32[1,128], index: 5, kind: input, shape index: {}]
  %s6 = inlined_call_operand.hbm [shape: f32[16,128], index: 6, kind: output, shape index: {0}]
  %s7 = inlined_call_operand.hbm [shape: f32[16,128], index: 7, kind: output, shape index: {1}]
  %8 = xla_tuple %s6, %s7
  %s9 = sld [smem:[#allocation0]]
  $region66: #{tpu_custom_call.1} parent=0
    _
  %s11 = ssub.s32 1, %s9
  %s12 = scalar_select 0, %s11, %s9
  $region1: #{tpu_custom_call.1} parent=0
    #allocation4 [shape = 'u8[4096]{0}', space=vmem, size = 0x1000, scoped, tag = 'input window, operand 0, single buffered']
    #allocation5 [shape = 's32[1]{0}', space=sflag, size = 0x4, scoped, tag = 'scoped memory for tpu_custom_call.1']
    #allocation6 [shape = 's32[1]{0}', space=sflag, size = 0x4, scoped, tag = 'scoped memory for tpu_custom_call.1']
    #allocation7 [shape = 'u8[4096]{0}', space=vmem, size = 0x1000, scoped, tag = 'input window, operand 1, single buffered']
    #allocation8 [shape = 's32[1]{0}', space=sflag, size = 0x4, scoped, tag = 'scoped memory for tpu_custom_call.1']
    #allocation9 [shape = 'u8[32768]{0}', space=vmem, size = 0x8000, scoped, tag = 'input window, operand 2, single buffered']
    #allocation10 [shape = 'u8[32768]{0}', space=vmem, size = 0x8000, scoped, tag = 'input window, operand 4, single buffered']
    #allocation11 [shape = 's32[1]{0}', space=sflag, size = 0x4, scoped, tag = 'scoped memory for tpu_custom_call.1']
    #allocation12 [shape = 'u8[8192]{0}', space=vmem, size = 0x2000, scoped, tag = 'output window, operand 0, single buffered']
    #allocation13 [shape = 'u8[8192]{0}', space=vmem, size = 0x2000, scoped, tag = 'output window, operand 1, single buffered']
    #allocation14 [shape = 's32[1]{0}', space=sflag, size = 0x4, scoped, tag = 'scoped memory for tpu_custom_call.1']
    %13 = vsyncpa [#allocation5], 0
    %14 = vsyncpa [#allocation8], 0
    %15 = vsyncpa [#allocation11], 0
    %16 = vsyncpa [#allocation6], 0
    %17 = vsyncpa [#allocation14], 0
    // Predicated region
    $region2: #{tpu_custom_call.1} parent=1 // pred_check
      _
    $region3: #{tpu_custom_call.1} parent=1 // pred_check_branch
      %19 = sbr.rel (0) target = $region5
    $region4: #{tpu_custom_call.1} parent=1 // pred_region
      %s21 = ssub.s32 128, 128
      %22 = vsyncadd [#allocation5], %s21
      %s23 = sshll.u32 [#allocation4], 4
      %s24 = int_to_ptr.vmem [resolvable:$true] %s23
      %29 = dma.hbm_to_vmem [thread:$0]  %s0, 128, %s24, [#allocation5], 64, 64, 4
    $region5: #{tpu_custom_call.1} parent=1 // pred_fallthru
      _
    // Predicated region
    $region6: #{tpu_custom_call.1} parent=1 // pred_check
      _
    $region7: #{tpu_custom_call.1} parent=1 // pred_check_branch
      %31 = sbr.rel (0) target = $region9
    $region8: #{tpu_custom_call.1} parent=1 // pred_region
      %s33 = ssub.s32 128, 128
      %34 = vsyncadd [#allocation8], %s33
      %s35 = sshll.u32 [#allocation7], 4
      %s36 = int_to_ptr.vmem [resolvable:$true] %s35
      %41 = dma.hbm_to_vmem [thread:$0]  %s1, 128, %s36, [#allocation8], 64, 64, 4
    $region9: #{tpu_custom_call.1} parent=1 // pred_fallthru
      _
    // Predicated region
    $region10: #{tpu_custom_call.1} parent=1 // pred_check
      _
    $region11: #{tpu_custom_call.1} parent=1 // pred_check_branch
      %43 = sbr.rel (0) target = $region13
    $region12: #{tpu_custom_call.1} parent=1 // pred_region
      %s45 = ssub.s32 1024, 1024
      %46 = vsyncadd [#allocation8], %s45
      %s47 = sshll.u32 [#allocation9], 4
      %s48 = int_to_ptr.vmem [resolvable:$true] %s47
      %53 = dma.hbm_to_vmem [thread:$0]  %s2, 1024, %s48, [#allocation8], 64, 64, 4
    $region13: #{tpu_custom_call.1} parent=1 // pred_fallthru
      _
    // Predicated region
    $region14: #{tpu_custom_call.1} parent=1 // pred_check
      _
    $region15: #{tpu_custom_call.1} parent=1 // pred_check_branch
      %55 = sbr.rel (0) target = $region17
    $region16: #{tpu_custom_call.1} parent=1 // pred_region
      _
    $region17: #{tpu_custom_call.1} parent=1 // pred_fallthru
      _
    // Predicated region
    $region18: #{tpu_custom_call.1} parent=1 // pred_check
      _
    $region19: #{tpu_custom_call.1} parent=1 // pred_check_branch
      %57 = sbr.rel (0) target = $region21
    $region20: #{tpu_custom_call.1} parent=1 // pred_region
      %s59 = ssub.s32 1024, 1024
      %60 = vsyncadd [#allocation11], %s59
      %s61 = sshll.u32 [#allocation10], 4
      %s62 = int_to_ptr.vmem [resolvable:$true] %s61
      %67 = dma.hbm_to_vmem [thread:$0]  %s4, 1024, %s62, [#allocation11], 64, 64, 4
    $region21: #{tpu_custom_call.1} parent=1 // pred_fallthru
      _
    // Predicated region
    $region22: #{tpu_custom_call.1} parent=1 // pred_check
      _
    $region23: #{tpu_custom_call.1} parent=1 // pred_check_branch
      %69 = sbr.rel (0) target = $region25
    $region24: #{tpu_custom_call.1} parent=1 // pred_region
      _
    $region25: #{tpu_custom_call.1} parent=1 // pred_fallthru
      _
    // Predicated region
    $region26: #{tpu_custom_call.1} parent=1 // pred_check
      _
    $region27: #{tpu_custom_call.1} parent=1 // pred_check_branch
      %71 = sbr.rel (0) target = $region29
    $region28: #{tpu_custom_call.1} parent=1 // pred_region
      %72 = dma.done [#allocation5], 128
    $region29: #{tpu_custom_call.1} parent=1 // pred_fallthru
      _
    // Predicated region
    $region30: #{tpu_custom_call.1} parent=1 // pred_check
      _
    $region31: #{tpu_custom_call.1} parent=1 // pred_check_branch
      %74 = sbr.rel (0) target = $region33
    $region32: #{tpu_custom_call.1} parent=1 // pred_region
      %75 = dma.done [#allocation8], 128
    $region33: #{tpu_custom_call.1} parent=1 // pred_fallthru
      _
    // Predicated region
    $region34: #{tpu_custom_call.1} parent=1 // pred_check
      _
    $region35: #{tpu_custom_call.1} parent=1 // pred_check_branch
      %77 = sbr.rel (0) target = $region37
    $region36: #{tpu_custom_call.1} parent=1 // pred_region
      %78 = dma.done [#allocation8], 1024
    $region37: #{tpu_custom_call.1} parent=1 // pred_fallthru
      _
    // Predicated region
    $region38: #{tpu_custom_call.1} parent=1 // pred_check
      _
    $region39: #{tpu_custom_call.1} parent=1 // pred_check_branch
      %80 = sbr.rel (0) target = $region41
    $region40: #{tpu_custom_call.1} parent=1 // pred_region
      %81 = dma.done [#allocation11], 1024
    $region41: #{tpu_custom_call.1} parent=1 // pred_fallthru
      _
    %p83 = scmp.eq.s32.totalorder 0, 0
    // Predicated region
    $region42: #{tpu_custom_call.1} parent=1 // pred_check
      %p84 = pneg %p83
    $region43: #{tpu_custom_call.1} parent=1 // pred_check_branch
      %86 = sbr.rel (%p84) target = $region45
    $region44: #{tpu_custom_call.1} parent=1 // pred_region
      %87 = vst [vmem:[#allocation2] sm:$0xff] 0.0
      %88 = vst [vmem:[#allocation2 + $0x8] sm:$0xff] 0.0
      %89 = vst [vmem:[#allocation3] sm:$0xff] 0.0
      %90 = vst [vmem:[#allocation3 + $0x8] sm:$0xff] 0.0
    $region45: #{tpu_custom_call.1} parent=1 // pred_fallthru
      _
    %v91 = vld [vmem:[#allocation9] sm:$0xf]
    %v92 = vld [vmem:[#allocation9 + $0x4] sm:$0xf]
    %v93 = vld [vmem:[#allocation9 + $0x8] sm:$0xf]
    %v94 = vld [vmem:[#allocation9 + $0xc] sm:$0xf]
    %v95 = vld [vmem:[#allocation9 + $0x10] sm:$0xf]
    %v96 = vld [vmem:[#allocation9 + $0x14] sm:$0xf]
    %v97 = vld [vmem:[#allocation9 + $0x18] sm:$0xf]
    %v98 = vld [vmem:[#allocation9 + $0x1c] sm:$0xf]
    %v99 = vld [vmem:[#allocation9 + $0x20] sm:$0xf]
    %v100 = vld [vmem:[#allocation9 + $0x24] sm:$0xf]
    %v101 = vld [vmem:[#allocation9 + $0x28] sm:$0xf]
    %v102 = vld [vmem:[#allocation9 + $0x2c] sm:$0xf]
    %v103 = vld [vmem:[#allocation9 + $0x30] sm:$0xf]
    %v104 = vld [vmem:[#allocation9 + $0x34] sm:$0xf]
    %v105 = vld [vmem:[#allocation9 + $0x38] sm:$0xf]
    %v106 = vld [vmem:[#allocation9 + $0x3c] sm:$0xf]
    %v107 = vld [vmem:[#allocation10] sm:$0xf]
    %v108 = vld [vmem:[#allocation10 + $0x4] sm:$0xf]
    %v109 = vld [vmem:[#allocation10 + $0x8] sm:$0xf]
    %v110 = vld [vmem:[#allocation10 + $0xc] sm:$0xf]
    %v111 = vld [vmem:[#allocation10 + $0x10] sm:$0xf]
    %v112 = vld [vmem:[#allocation10 + $0x14] sm:$0xf]
    %v113 = vld [vmem:[#allocation10 + $0x18] sm:$0xf]
    %v114 = vld [vmem:[#allocation10 + $0x1c] sm:$0xf]
    %v115 = vld [vmem:[#allocation10 + $0x20] sm:$0xf]
    %v116 = vld [vmem:[#allocation10 + $0x24] sm:$0xf]
    %v117 = vld [vmem:[#allocation10 + $0x28] sm:$0xf]
    %v118 = vld [vmem:[#allocation10 + $0x2c] sm:$0xf]
    %v119 = vld [vmem:[#allocation10 + $0x30] sm:$0xf]
    %v120 = vld [vmem:[#allocation10 + $0x34] sm:$0xf]
    %v121 = vld [vmem:[#allocation10 + $0x38] sm:$0xf]
    %v122 = vld [vmem:[#allocation10 + $0x3c] sm:$0xf]
    %v123 = vld [vmem:[%s3] sm:$0x1]
    %v124 = vld [vmem:[#allocation4] sm:$0xf]
    %v125 = vld [vmem:[#allocation4 + $0x4] sm:$0xf]
    %v127 = vlaneseq
    %v128 = vshrl.u32 %v127, 7
    %v129 = vsub.s32 0, %v128
    %v130 = vrot.slane %v123, %v129
    %v134 = vunpack.c.l.b16 %v124
    %v135 = vunpack.c.l.b16 %v125
    %v136 = vpack.c.b16 %v135, %v134
    %v154 = vunpack.c.l.b16 %v91
    %v155 = vunpack.c.l.b16 %v92
    %v156 = vunpack.c.l.b16 %v93
    %v157 = vunpack.c.l.b16 %v94
    %v158 = vunpack.c.l.b16 %v95
    %v159 = vunpack.c.l.b16 %v96
    %v160 = vunpack.c.l.b16 %v97
    %v161 = vunpack.c.l.b16 %v98
    %v162 = vunpack.c.l.b16 %v99
    %v163 = vunpack.c.l.b16 %v100
    %v164 = vunpack.c.l.b16 %v101
    %v165 = vunpack.c.l.b16 %v102
    %v166 = vunpack.c.l.b16 %v103
    %v167 = vunpack.c.l.b16 %v104
    %v168 = vunpack.c.l.b16 %v105
    %v169 = vunpack.c.l.b16 %v106
    %v170 = vpack.c.b16 %v155, %v154
    %v171 = vpack.c.b16 %v157, %v156
    %v172 = vpack.c.b16 %v159, %v158
    %v173 = vpack.c.b16 %v161, %v160
    %v174 = vpack.c.b16 %v163, %v162
    %v175 = vpack.c.b16 %v165, %v164
    %v176 = vpack.c.b16 %v167, %v166
    %v177 = vpack.c.b16 %v169, %v168
    %186 = vmatprep.subr.bf16.mxu0 0
    %187 = vmatpush1.bf16.msra.mxu0 %v170
    %188 = vmatprep.subr.bf16.mxu0 0
    %189 = vmatpush1.bf16.msra.mxu0 %v171
    %190 = vmatprep.subr.bf16.mxu0 0
    %191 = vmatpush1.bf16.msra.mxu0 %v172
    %192 = vmatprep.subr.bf16.mxu0 0
    %193 = vmatpush1.bf16.msra.mxu0 %v173
    %194 = vmatprep.subr.bf16.mxu0 0
    %195 = vmatpush1.bf16.msra.mxu0 %v174
    %196 = vmatprep.subr.bf16.mxu0 0
    %197 = vmatpush1.bf16.msra.mxu0 %v175
    %198 = vmatprep.subr.bf16.mxu0 0
    %199 = vmatpush1.bf16.msra.mxu0 %v176
    %200 = vmatprep.subr.bf16.mxu0 0
    %201 = vmatpush1.bf16.msra.mxu0 %v177
    %202 = vmatprep.subr.bf16.mxu0 0
    %203 = vmatpush1.bf16.msra.mxu0 0
    %204 = vmatprep.subr.bf16.mxu0 0
    %205 = vmatpush1.bf16.msra.mxu0 0
    %206 = vmatprep.subr.bf16.mxu0 0
    %207 = vmatpush1.bf16.msra.mxu0 0
    %208 = vmatprep.subr.bf16.mxu0 0
    %209 = vmatpush1.bf16.msra.mxu0 0
    %210 = vmatprep.subr.bf16.mxu0 0
    %211 = vmatpush1.bf16.msra.mxu0 0
    %212 = vmatprep.subr.bf16.mxu0 0
    %213 = vmatpush1.bf16.msra.mxu0 0
    %214 = vmatprep.subr.bf16.mxu0 0
    %215 = vmatpush1.bf16.msra.mxu0 0
    %216 = vmatprep.subr.bf16.mxu0 0
    %217 = vmatpush1.bf16.msra.mxu0 0
    %218 = vmatprep.mubr.bf16.mxu0 0
    %219 = vmatmul.mubr.bf16.gmra.mrb[0].mxu0 %v136
    %v220 = vpop.f32.mrb[0].mxu0
    %v221 = vadd.f32 %v130, %v220
    %v222 = vpop.f32.mrb[0].mxu0
    %v223 = vpop.f32.mrb[0].mxu0
    %v224 = vadd.f32 %v130, %v223
    %v225 = vpop.f32.mrb[0].mxu0
    %226 = vdwg.mxu0
    %v227 = vmul.f32 %v221, %v221
    %v228 = vmul.f32 %v224, %v224
    %v229 = vmul.f32 %v221, %v227
    %v230 = vmul.f32 %v224, %v228
    %v231 = vmul.f32 %v229, 0.044715
    %v232 = vmul.f32 %v230, 0.044715
    %v233 = vadd.f32 %v221, %v231
    %v234 = vadd.f32 %v224, %v232
    %v235 = vmul.f32 %v233, 0.7978846
    %v236 = vmul.f32 %v234, 0.7978846
    %v237 = vtanh.pop %v235
    %v238 = vtanh.pop %v236
    %v239 = vadd.f32 %v237, 1.0
    %v240 = vadd.f32 %v238, 1.0
    %v241 = vmul.f32 %v239, 0.5
    %v242 = vmul.f32 %v240, 0.5
    %v243 = vmul.f32 %v221, %v241
    %v244 = vmul.f32 %v224, %v242
    %v245 = vld [vmem:[#allocation2] sm:$0xff]
    %v246 = vld [vmem:[#allocation2 + $0x8] sm:$0xff]
    %v247 = vpack.c.bf16 %v244, %v243
    %v264 = vunpack.c.l.b16 %v107
    %v265 = vunpack.c.l.b16 %v108
    %v266 = vunpack.c.l.b16 %v109
    %v267 = vunpack.c.l.b16 %v110
    %v268 = vunpack.c.l.b16 %v111
    %v269 = vunpack.c.l.b16 %v112
    %v270 = vunpack.c.l.b16 %v113
    %v271 = vunpack.c.l.b16 %v114
    %v272 = vunpack.c.l.b16 %v115
    %v273 = vunpack.c.l.b16 %v116
    %v274 = vunpack.c.l.b16 %v117
    %v275 = vunpack.c.l.b16 %v118
    %v276 = vunpack.c.l.b16 %v119
    %v277 = vunpack.c.l.b16 %v120
    %v278 = vunpack.c.l.b16 %v121
    %v279 = vunpack.c.l.b16 %v122
    %v280 = vpack.c.b16 %v265, %v264
    %v281 = vpack.c.b16 %v267, %v266
    %v282 = vpack.c.b16 %v269, %v268
    %v283 = vpack.c.b16 %v271, %v270
    %v284 = vpack.c.b16 %v273, %v272
    %v285 = vpack.c.b16 %v275, %v274
    %v286 = vpack.c.b16 %v277, %v276
    %v287 = vpack.c.b16 %v279, %v278
    %296 = vmatprep.subr.bf16.mxu0 0
    %297 = vmatpush1.bf16.msra.mxu0 %v280
    %298 = vmatprep.subr.bf16.mxu0 0
    %299 = vmatpush1.bf16.msra.mxu0 %v281
    %300 = vmatprep.subr.bf16.mxu0 0
    %301 = vmatpush1.bf16.msra.mxu0 %v282
    %302 = vmatprep.subr.bf16.mxu0 0
    %303 = vmatpush1.bf16.msra.mxu0 %v283
    %304 = vmatprep.subr.bf16.mxu0 0
    %305 = vmatpush1.bf16.msra.mxu0 %v284
    %306 = vmatprep.subr.bf16.mxu0 0
    %307 = vmatpush1.bf16.msra.mxu0 %v285
    %308 = vmatprep.subr.bf16.mxu0 0
    %309 = vmatpush1.bf16.msra.mxu0 %v286
    %310 = vmatprep.subr.bf16.mxu0 0
    %311 = vmatpush1.bf16.msra.mxu0 %v287
    %312 = vmatprep.subr.bf16.mxu0 0
    %313 = vmatpush1.bf16.msra.mxu0 0
    %314 = vmatprep.subr.bf16.mxu0 0
    %315 = vmatpush1.bf16.msra.mxu0 0
    %316 = vmatprep.subr.bf16.mxu0 0
    %317 = vmatpush1.bf16.msra.mxu0 0
    %318 = vmatprep.subr.bf16.mxu0 0
    %319 = vmatpush1.bf16.msra.mxu0 0
    %320 = vmatprep.subr.bf16.mxu0 0
    %321 = vmatpush1.bf16.msra.mxu0 0
    %322 = vmatprep.subr.bf16.mxu0 0
    %323 = vmatpush1.bf16.msra.mxu0 0
    %324 = vmatprep.subr.bf16.mxu0 0
    %325 = vmatpush1.bf16.msra.mxu0 0
    %326 = vmatprep.subr.bf16.mxu0 0
    %327 = vmatpush1.bf16.msra.mxu0 0
    %328 = vmatprep.mubr.bf16.mxu0 0
    %329 = vmatmul.mubr.bf16.gmra.mrb[0].mxu0 %v247
    %v330 = vpop.f32.mrb[0].mxu0
    %v331 = vadd.f32 0.0, %v330
    %v332 = vpop.f32.mrb[0].mxu0
    %v333 = vpop.f32.mrb[0].mxu0
    %v334 = vadd.f32 0.0, %v333
    %v335 = vpop.f32.mrb[0].mxu0
    %336 = vdwg.mxu0
    %v337 = vadd.f32 %v245, %v331
    %v338 = vadd.f32 %v246, %v334
    %339 = vst [vmem:[#allocation2] sm:$0xff] %v337
    %340 = vst [vmem:[#allocation2 + $0x8] sm:$0xff] %v338
    %v341 = vld [vmem:[#allocation7] sm:$0xf]
    %v342 = vld [vmem:[#allocation7 + $0x4] sm:$0xf]
    %v345 = vunpack.c.l.b16 %v341
    %v346 = vunpack.c.l.b16 %v342
    %v347 = vpack.c.b16 %v346, %v345
    %349 = vmatprep.subr.bf16.mxu0 0
    %350 = vmatpush1.bf16.msra.mxu0 %v170
    %351 = vmatprep.subr.bf16.mxu0 0
    %352 = vmatpush1.bf16.msra.mxu0 %v171
    %353 = vmatprep.subr.bf16.mxu0 0
    %354 = vmatpush1.bf16.msra.mxu0 %v172
    %355 = vmatprep.subr.bf16.mxu0 0
    %356 = vmatpush1.bf16.msra.mxu0 %v173
    %357 = vmatprep.subr.bf16.mxu0 0
    %358 = vmatpush1.bf16.msra.mxu0 %v174
    %359 = vmatprep.subr.bf16.mxu0 0
    %360 = vmatpush1.bf16.msra.mxu0 %v175
    %361 = vmatprep.subr.bf16.mxu0 0
    %362 = vmatpush1.bf16.msra.mxu0 %v176
    %363 = vmatprep.subr.bf16.mxu0 0
    %364 = vmatpush1.bf16.msra.mxu0 %v177
    %365 = vmatprep.subr.bf16.mxu0 0
    %366 = vmatpush1.bf16.msra.mxu0 0
    %367 = vmatprep.subr.bf16.mxu0 0
    %368 = vmatpush1.bf16.msra.mxu0 0
    %369 = vmatprep.subr.bf16.mxu0 0
    %370 = vmatpush1.bf16.msra.mxu0 0
    %371 = vmatprep.subr.bf16.mxu0 0
    %372 = vmatpush1.bf16.msra.mxu0 0
    %373 = vmatprep.subr.bf16.mxu0 0
    %374 = vmatpush1.bf16.msra.mxu0 0
    %375 = vmatprep.subr.bf16.mxu0 0
    %376 = vmatpush1.bf16.msra.mxu0 0
    %377 = vmatprep.subr.bf16.mxu0 0
    %378 = vmatpush1.bf16.msra.mxu0 0
    %379 = vmatprep.subr.bf16.mxu0 0
    %380 = vmatpush1.bf16.msra.mxu0 0
    %381 = vmatprep.mubr.bf16.mxu0 0
    %382 = vmatmul.mubr.bf16.gmra.mrb[0].mxu0 %v347
    %v383 = vpop.f32.mrb[0].mxu0
    %v384 = vadd.f32 %v130, %v383
    %v385 = vpop.f32.mrb[0].mxu0
    %v386 = vpop.f32.mrb[0].mxu0
    %v387 = vadd.f32 %v130, %v386
    %v388 = vpop.f32.mrb[0].mxu0
    %389 = vdwg.mxu0
    %v390 = vmul.f32 %v384, %v384
    %v391 = vmul.f32 %v387, %v387
    %v392 = vmul.f32 %v384, %v390
    %v393 = vmul.f32 %v387, %v391
    %v394 = vmul.f32 %v392, 0.044715
    %v395 = vmul.f32 %v393, 0.044715
    %v396 = vadd.f32 %v384, %v394
    %v397 = vadd.f32 %v387, %v395
    %v398 = vmul.f32 %v396, 0.7978846
    %v399 = vmul.f32 %v397, 0.7978846
    %v400 = vtanh.pop %v398
    %v401 = vtanh.pop %v399
    %v402 = vadd.f32 %v400, 1.0
    %v403 = vadd.f32 %v401, 1.0
    %v404 = vmul.f32 %v402, 0.5
    %v405 = vmul.f32 %v403, 0.5
    %v406 = vmul.f32 %v384, %v404
    %v407 = vmul.f32 %v387, %v405
    %v408 = vld [vmem:[#allocation3] sm:$0xff]
    %v409 = vld [vmem:[#allocation3 + $0x8] sm:$0xff]
    %v410 = vpack.c.bf16 %v407, %v406
    %411 = vmatprep.subr.bf16.mxu0 0
    %412 = vmatpush1.bf16.msra.mxu0 %v280
    %413 = vmatprep.subr.bf16.mxu0 0
    %414 = vmatpush1.bf16.msra.mxu0 %v281
    %415 = vmatprep.subr.bf16.mxu0 0
    %416 = vmatpush1.bf16.msra.mxu0 %v282
    %417 = vmatprep.subr.bf16.mxu0 0
    %418 = vmatpush1.bf16.msra.mxu0 %v283
    %419 = vmatprep.subr.bf16.mxu0 0
    %420 = vmatpush1.bf16.msra.mxu0 %v284
    %421 = vmatprep.subr.bf16.mxu0 0
    %422 = vmatpush1.bf16.msra.mxu0 %v285
    %423 = vmatprep.subr.bf16.mxu0 0
    %424 = vmatpush1.bf16.msra.mxu0 %v286
    %425 = vmatprep.subr.bf16.mxu0 0
    %426 = vmatpush1.bf16.msra.mxu0 %v287
    %427 = vmatprep.subr.bf16.mxu0 0
    %428 = vmatpush1.bf16.msra.mxu0 0
    %429 = vmatprep.subr.bf16.mxu0 0
    %430 = vmatpush1.bf16.msra.mxu0 0
    %431 = vmatprep.subr.bf16.mxu0 0
    %432 = vmatpush1.bf16.msra.mxu0 0
    %433 = vmatprep.subr.bf16.mxu0 0
    %434 = vmatpush1.bf16.msra.mxu0 0
    %435 = vmatprep.subr.bf16.mxu0 0
    %436 = vmatpush1.bf16.msra.mxu0 0
    %437 = vmatprep.subr.bf16.mxu0 0
    %438 = vmatpush1.bf16.msra.mxu0 0
    %439 = vmatprep.subr.bf16.mxu0 0
    %440 = vmatpush1.bf16.msra.mxu0 0
    %441 = vmatprep.subr.bf16.mxu0 0
    %442 = vmatpush1.bf16.msra.mxu0 0
    %443 = vmatprep.mubr.bf16.mxu0 0
    %444 = vmatmul.mubr.bf16.gmra.mrb[0].mxu0 %v410
    %v445 = vpop.f32.mrb[0].mxu0
    %v446 = vadd.f32 0.0, %v445
    %v447 = vpop.f32.mrb[0].mxu0
    %v448 = vpop.f32.mrb[0].mxu0
    %v449 = vadd.f32 0.0, %v448
    %v450 = vpop.f32.mrb[0].mxu0
    %451 = vdwg.mxu0
    %v452 = vadd.f32 %v408, %v446
    %v453 = vadd.f32 %v409, %v449
    %454 = vst [vmem:[#allocation3] sm:$0xff] %v452
    %455 = vst [vmem:[#allocation3 + $0x8] sm:$0xff] %v453
    // Predicated region
    $region46: #{tpu_custom_call.1} parent=1 // pred_check
      %p456 = pneg %p83
    $region47: #{tpu_custom_call.1} parent=1 // pred_check_branch
      %458 = sbr.rel (%p456) target = $region49
    $region48: #{tpu_custom_call.1} parent=1 // pred_region
      %v459 = vld [vmem:[%s5] sm:$0x1]
      %v460 = vld [vmem:[#allocation2] sm:$0xff]
      %v461 = vld [vmem:[#allocation2 + $0x8] sm:$0xff]
      %v463 = vlaneseq
      %v464 = vshrl.u32 %v463, 7
      %v465 = vsub.s32 0, %v464
      %v466 = vrot.slane %v459, %v465
      %v468 = vadd.f32 %v460, %v466
      %v469 = vadd.f32 %v461, %v466
      %470 = vst [vmem:[#allocation12] sm:$0xff] %v468
      %471 = vst [vmem:[#allocation12 + $0x8] sm:$0xff] %v469
      %v472 = vld [vmem:[#allocation3] sm:$0xff]
      %v473 = vld [vmem:[#allocation3 + $0x8] sm:$0xff]
      %v474 = vadd.f32 %v472, %v466
      %v475 = vadd.f32 %v473, %v466
      %476 = vst [vmem:[#allocation13] sm:$0xff] %v474
      %477 = vst [vmem:[#allocation13 + $0x8] sm:$0xff] %v475
    $region49: #{tpu_custom_call.1} parent=1 // pred_fallthru
      _
    // Predicated region
    $region50: #{tpu_custom_call.1} parent=1 // pred_check
      _
    $region51: #{tpu_custom_call.1} parent=1 // pred_check_branch
      %479 = sbr.rel (0) target = $region53
    $region52: #{tpu_custom_call.1} parent=1 // pred_region
      %s481 = ssub.s32 256, 256
      %482 = vsyncadd [#allocation6], %s481
      %s483 = sshll.u32 [#allocation12], 4
      %s484 = int_to_ptr.vmem [resolvable:$true] %s483
      %489 = dma.vmem_to_hbm [thread:$0]  %s484, 256, %s6, [#allocation6], 128, 128, 8
    $region53: #{tpu_custom_call.1} parent=1 // pred_fallthru
      _
    // Predicated region
    $region54: #{tpu_custom_call.1} parent=1 // pred_check
      _
    $region55: #{tpu_custom_call.1} parent=1 // pred_check_branch
      %491 = sbr.rel (0) target = $region57
    $region56: #{tpu_custom_call.1} parent=1 // pred_region
      %s493 = ssub.s32 256, 256
      %494 = vsyncadd [#allocation14], %s493
      %s495 = sshll.u32 [#allocation13], 4
      %s496 = int_to_ptr.vmem [resolvable:$true] %s495
      %501 = dma.vmem_to_hbm [thread:$0]  %s496, 256, %s7, [#allocation14], 128, 128, 8
    $region57: #{tpu_custom_call.1} parent=1 // pred_fallthru
      _
    // Predicated region
    $region58: #{tpu_custom_call.1} parent=1 // pred_check
      _
    $region59: #{tpu_custom_call.1} parent=1 // pred_check_branch
      %503 = sbr.rel (0) target = $region61
    $region60: #{tpu_custom_call.1} parent=1 // pred_region
      %504 = dma.done [#allocation6], 256
    $region61: #{tpu_custom_call.1} parent=1 // pred_fallthru
      _
    // Predicated region
    $region62: #{tpu_custom_call.1} parent=1 // pred_check
      _
    $region63: #{tpu_custom_call.1} parent=1 // pred_check_branch
      %506 = sbr.rel (0) target = $region65
    $region64: #{tpu_custom_call.1} parent=1 // pred_region
      %507 = dma.done [#allocation14], 256
    $region65: #{tpu_custom_call.1} parent=1 // pred_fallthru
      _
    %508 = vsyncpa [#allocation5], 1
    %509 = vsyncpa [#allocation8], 1
    %510 = vsyncpa [#allocation11], 1
    %511 = vsyncpa [#allocation6], 1
    %512 = vsyncpa [#allocation14], 1

</llo_original>
